<compile_context>
chip_gen: v7x
topology: tpu7x:2x2x1
jax: 0.10.0
libtpu: 0.0.40
codegen_flags: <defaults>
</compile_context>

<pallas_src>
import functools

import numpy as np
import jax
import jax.numpy as jnp
from jax import lax
from jax.experimental import pallas as pl
from jax.experimental.pallas import tpu as pltpu

_BN_EPS = 1e-5


# ------------------------------ fused kernel -------------------------------

def _fractal_kernel(x_ref, w_ref, shift_ref, o_ref, *,
                    n_columns, max_depth, count, block_idx,
                    C_out, L, TB, deepest, mm_dtype):
    """Whole FractalBlock forward for one batch tile, lane-dense layout.

    x_ref:     (TB, C_in, L)              input tile (NCL, as stored in HBM)
    w_ref:     (n_blocks, 3*C_out, CM)    packed conv weights, taps stacked on
                                          the M axis, BN scale pre-folded
    shift_ref: (n_blocks, C_out, 1)       folded BN shift
    o_ref:     (TB, C_out, L)             output tile (NCL)
    """
    N = TB * L

    # Halo masks of the k=3 zero-padded conv, built once per grid step.
    idx = lax.broadcasted_iota(jnp.int32, (1, N), 1)
    pos = idx if TB == 1 else idx % L                  # position within a row
    mask_l = jnp.where(pos != 0, 1.0, 0.0)             # kills the x[-1] wrap
    mask_r = jnp.where(pos != L - 1, 1.0, 0.0)         # kills the x[L] wrap

    def conv_bn_relu(a, j):
        """One ConvBlock: stacked-tap MXU matmul + rolled tap shifts + ReLU."""
        c_in_cur = a.shape[0]
        w = w_ref[j][:, :c_in_cur].astype(mm_dtype)    # (3*C_out, c_in_cur)
        z = lax.dot_general(w, a.astype(mm_dtype),     # one MXU push per block
                            dimension_numbers=(((1,), (0,)), ((), ())),
                            preferred_element_type=jnp.float32)  # (3*C_out, N)
        z0 = z[0:C_out]                                # tap k=0 -> needs x[l-1]
        z1 = z[C_out:2 * C_out]                        # tap k=1 -> x[l]
        z2 = z[2 * C_out:]                             # tap k=2 -> x[l+1]
        y = z1 + shift_ref[j]                          # BN shift (scale folded)
        y = y + mask_l * pltpu.roll(z0, 1, axis=1)     # z0[l-1], zero at l=0
        y = y + mask_r * pltpu.roll(z2, N - 1, axis=1) # z2[l+1], zero at l=L-1
        return jnp.maximum(y, 0.0)

    # NCL tile -> (C_in, TB*L) lane-dense activation (once per grid step).
    xs = [x_ref[b].astype(jnp.float32) for b in range(TB)]
    x = xs[0] if TB == 1 else jnp.concatenate(xs, axis=1)

    # TODO(synk): for n_columns >= 4 keep the per-column activations in a
    # (n_columns, C_out, TB*L) VMEM scratch ref instead of live SSA values to
    # bound vreg/VMEM live ranges (review feedback); <=3 columns fit easily.
    outs = [x] * n_columns
    for i in range(max_depth):
        st = (n_columns - 1) if deepest else (n_columns - count[i])
        cur = [conv_bn_relu(outs[c], block_idx[(c, i)])
               for c in range(st, n_columns)]
        joined = cur[0]
        for t in cur[1:]:
            joined = joined + t
        if len(cur) > 1:
            joined = joined * (1.0 / len(cur))         # eval-mode mean join
        for c in range(st, n_columns):
            outs[c] = joined

    # (C_out, TB*L) -> NCL output tile (lane-dense stores).
    y = outs[-1]
    if TB == 1:
        o_ref[0] = y.astype(o_ref.dtype)
    else:
        for b in range(TB):
            o_ref[b] = y[:, b * L:(b + 1) * L].astype(o_ref.dtype)


# ------------------------------ FractalBlock -------------------------------

class FractalBlockPallas:
    """Eval-mode FractalBlock (mean join; BN running stats folded; no dropout)."""
    # TODO(synk): training-mode drop-path join (drop_mask / global_cols uses
    # host-side numpy RNG), FD/CDBR dropout with p>0, the doubling=True 1x1
    # doubler and pad_type='reflect' are not implemented (eval semantics only).

    def __init__(self, key, n_columns, C_in, C_out, use_bf16_matmul=False):
        self.n_columns = n_columns
        self.C_in, self.C_out = C_in, C_out
        self.CM = max(C_in, C_out)
        self.max_depth = 2 ** (n_columns - 1)
        self.count = np.zeros([self.max_depth], dtype=int)
        # bf16 MXU operands (v6e/v7x feedback); accumulation/epilogue stay f32.
        self.mm_dtype = jnp.bfloat16 if use_bf16_matmul else jnp.float32

        raw = {}                                   # (col, depth) -> (w, scale, shift)
        order = []
        dist = self.max_depth
        for c in range(n_columns):
            for i in range(self.max_depth):
                if (i + 1) % dist == 0:
                    first_block = (i + 1 == dist)
                    cur_C_in = C_in if first_block else C_out       # doubling=False
                    key, kw, kg, kb = jax.random.split(key, 4)
                    w = 0.1 * jax.random.normal(kw, (3, cur_C_in, C_out), jnp.float32)
                    gamma = jax.random.uniform(kg, (C_out,), jnp.float32, 0.5, 1.5)
                    beta = 0.1 * jax.random.normal(kb, (C_out,), jnp.float32)
                    running_mean = jnp.zeros((C_out,), jnp.float32)
                    running_var = jnp.ones((C_out,), jnp.float32)
                    scale = gamma / jnp.sqrt(running_var + _BN_EPS)  # folded BN
                    shift = beta - running_mean * scale
                    raw[(c, i)] = (w, scale, shift)
                    order.append((c, i))
                    self.count[i] += 1
            dist //= 2

        self.raw_blocks = raw
        self.block_idx = {ci: j for j, ci in enumerate(order)}
        n_blocks = len(order)

        # Pack weights for the fused kernel: the three taps are stacked along
        # the output (M) axis -> lhs (3*C_out, CM); the BN scale is folded in
        # (review feedback), so the kernel only adds the shift after the MXU.
        CM = self.CM
        w_all = np.zeros((n_blocks, 3 * C_out, CM), np.float32)
        sh_all = np.zeros((n_blocks, C_out, 1), np.float32)
        for (c, i), j in self.block_idx.items():
            w, scale, shift = raw[(c, i)]
            w_np = np.asarray(w)                   # (3, cin, C_out)
            s_np = np.asarray(scale)               # (C_out,)
            cin = w_np.shape[1]
            for k in range(3):
                w_all[j, k * C_out:(k + 1) * C_out, :cin] = w_np[k].T * s_np[:, None]
            sh_all[j, :, 0] = np.asarray(shift)
        self.w_all = jnp.asarray(w_all, dtype=self.mm_dtype)
        self.shift_all = jnp.asarray(sh_all)
        self._vmem_limit = self._vmem_limit_bytes()

    @staticmethod
    def _vmem_limit_bytes():
        # Generation-aware scoped-VMEM budget: ~3/4 of physical VMEM
        # (~96 MiB on v5e/v6e with 128 MiB/core, ~48 MiB on v7x with 64 MiB).
        cap = 64 * 1024 * 1024
        try:
            info = pltpu.get_tpu_info()
            cap = int(getattr(info, "vmem_capacity_bytes", cap)) or cap
        except Exception:
            pass
        return min(100 * 1024 * 1024, max(32 * 1024 * 1024, (3 * cap) // 4))

    @staticmethod
    def _batch_tile(B, L):
        # Lane-dense tiles: target TB*L ~ 1-2K lanes per grid step, keep the
        # grid at >=2 steps (ideally >=4) for pipelining / v7x's two
        # TensorCores, and TB | B so there is no ragged tail tile.
        cap = max(1, min(B, 2048 // max(L, 1)))
        if B >= 4:
            cap = min(cap, B // 4)
        elif B >= 2:
            cap = min(cap, B // 2)
        cap = max(cap, 1)
        for d in range(cap, 0, -1):
            if B % d == 0:
                return d
        return 1

    def __call__(self, x_ncl, deepest=False):
        """x_ncl: (B, C_in, L) PyTorch NCL layout -> (B, C_out, L); no wrapper transposes."""
        B, Cin, L = x_ncl.shape
        assert Cin == self.C_in
        TB = self._batch_tile(B, L)
        grid = (B // TB,)
        CM, C_out = self.CM, self.C_out
        n_blocks = self.w_all.shape[0]

        kernel = functools.partial(
            _fractal_kernel,
            n_columns=self.n_columns, max_depth=self.max_depth,
            count=tuple(int(v) for v in self.count), block_idx=self.block_idx,
            C_out=C_out, L=L, TB=TB, deepest=bool(deepest),
            mm_dtype=self.mm_dtype)

        # TODO(synk): for B == 1 add an L-tiling grid axis (overlapping halo
        # blocks) so v7x's two TensorCores are both used, and single-buffer the
        # grid-invariant weight/shift operands (pipeline_mode=pl.Buffered(1))
        # to free VMEM for a larger TB on v7x.
        return pl.pallas_call(
            kernel,
            grid=grid,
            in_specs=[
                pl.BlockSpec((TB, Cin, L), lambda b: (b, 0, 0)),
                pl.BlockSpec((n_blocks, 3 * C_out, CM), lambda b: (0, 0, 0)),
                pl.BlockSpec((n_blocks, C_out, 1), lambda b: (0, 0, 0)),
            ],
            out_specs=pl.BlockSpec((TB, C_out, L), lambda b: (b, 0, 0)),
            out_shape=jax.ShapeDtypeStruct((B, C_out, L), jnp.float32),
            compiler_params=pltpu.CompilerParams(
                dimension_semantics=("parallel",),
                vmem_limit_bytes=self._vmem_limit),
        )(x_ncl, self.w_all, self.shift_all)

    # ---------------------- pure-JAX reference path ------------------------

    def reference(self, x_ncl, deepest=False):
        def conv_block(x_, w, scale, shift):
            w_oik = jnp.transpose(w, (2, 1, 0))        # (C_out, C_in, K)
            y = lax.conv_general_dilated(
                x_, w_oik, window_strides=(1,), padding=[(1, 1)],
                dimension_numbers=("NCH", "OIH", "NCH"))
            y = y * scale.reshape(1, -1, 1) + shift.reshape(1, -1, 1)
            return jnp.maximum(y, 0.0)

        outs = [x_ncl] * self.n_columns
        for i in range(self.max_depth):
            st = (self.n_columns - 1) if deepest else (self.n_columns - int(self.count[i]))
            cur = [conv_block(outs[c], *self.raw_blocks[(c, i)])
                   for c in range(st, self.n_columns)]
            joined = jnp.mean(jnp.stack(cur, 0), axis=0)
            for c in range(st, self.n_columns):
                outs[c] = joined
        return outs[-1]


if __name__ == "__main__":
    n_columns, C_in, C_out, B, L = 3, 4, 8, 2, 128
    key_params, key_x = jax.random.split(jax.random.PRNGKey(0))
    block = FractalBlockPallas(key_params, n_columns, C_in, C_out)

    x = jax.random.normal(key_x, (B, C_in, L), jnp.float32)

    y = jax.block_until_ready(block(x))                       # fused Pallas path
    y_ref = jax.block_until_ready(block.reference(x))         # pure-JAX reference
    assert y.shape == (B, C_out, L)
    np.testing.assert_allclose(np.asarray(y), np.asarray(y_ref),
                               rtol=1e-4, atol=1e-4)

    y_d = jax.block_until_ready(block(x, deepest=True))
    y_d_ref = jax.block_until_ready(block.reference(x, deepest=True))
    np.testing.assert_allclose(np.asarray(y_d), np.asarray(y_d_ref),
                               rtol=1e-4, atol=1e-4)

    # bf16 MXU-operand variant (v6e / v7x feedback); f32 accumulation, so only
    # a small numeric shift vs. the f32 reference.
    block_bf16 = FractalBlockPallas(key_params, n_columns, C_in, C_out,
                                    use_bf16_matmul=True)
    y_bf16 = jax.block_until_ready(block_bf16(x))
    np.testing.assert_allclose(np.asarray(y_bf16), np.asarray(y_ref),
                               rtol=5e-2, atol=5e-2)

    print("KERNEL_OK")
</pallas_src>

<mosaic_0001>
module attributes {stable_mosaic.version = 11 : i64} {
  func.func @_fractal_kernel(%arg0: i32, %arg1: memref<1x4x128xf32, #tpu.memory_space<vmem>>, %arg2: memref<7x24x8xf32, #tpu.memory_space<vmem>>, %arg3: memref<7x8x1xf32, #tpu.memory_space<vmem>>, %arg4: memref<1x8x128xf32, #tpu.memory_space<vmem>>) attributes {dimension_semantics = [#tpu.dimension_semantics<parallel>], iteration_bounds = array<i64: 2>, scalar_prefetch = 0 : i64, scratch_operands = 0 : i64, tpu.core_type = #tpu.core_type<tc>, window_params = [{transform_indices = @transform_0, window_bounds = array<i64: 1, 4, 128>}, {pipeline_mode = #tpu.pipeline_mode<synchronous>, transform_indices = @transform_1, window_bounds = array<i64: 7, 24, 8>}, {pipeline_mode = #tpu.pipeline_mode<synchronous>, transform_indices = @transform_2, window_bounds = array<i64: 7, 8, 1>}, {transform_indices = @transform_3, window_bounds = array<i64: 1, 8, 128>}]} {
    %0 = tpu.iota {dimensions = array<i32: 1>} : vector<1x128xi32>
    %c0_i32 = arith.constant 0 : i32
    %1 = vector.broadcast %c0_i32 : i32 to vector<1x128xi32>
    %2 = arith.cmpi ne, %0, %1 : vector<1x128xi32>
    %cst = arith.constant 1.000000e+00 : f32
    %cst_0 = arith.constant 0.000000e+00 : f32
    %3 = vector.broadcast %cst : f32 to vector<1x128xf32>
    %4 = vector.broadcast %cst_0 : f32 to vector<1x128xf32>
    %5 = arith.select %2, %3, %4 : vector<1x128xi1>, vector<1x128xf32>
    %c127_i32 = arith.constant 127 : i32
    %6 = vector.broadcast %c127_i32 : i32 to vector<1x128xi32>
    %7 = arith.cmpi ne, %0, %6 : vector<1x128xi32>
    %cst_1 = arith.constant 1.000000e+00 : f32
    %cst_2 = arith.constant 0.000000e+00 : f32
    %8 = vector.broadcast %cst_1 : f32 to vector<1x128xf32>
    %9 = vector.broadcast %cst_2 : f32 to vector<1x128xf32>
    %10 = arith.select %7, %8, %9 : vector<1x128xi1>, vector<1x128xf32>
    %c0 = arith.constant 0 : index
    %c0_3 = arith.constant 0 : index
    %c0_4 = arith.constant 0 : index
    %11 = vector.load %arg1[%c0, %c0_3, %c0_4] : memref<1x4x128xf32, #tpu.memory_space<vmem>>, vector<1x4x128xf32>
    %12 = vector.shape_cast %11 : vector<1x4x128xf32> to vector<4x128xf32>
    %c3 = arith.constant 3 : index
    %c0_5 = arith.constant 0 : index
    %c0_6 = arith.constant 0 : index
    %13 = vector.load %arg2[%c3, %c0_5, %c0_6] : memref<7x24x8xf32, #tpu.memory_space<vmem>>, vector<1x24x8xf32>
    %14 = vector.shape_cast %13 : vector<1x24x8xf32> to vector<24x8xf32>
    %15 = vector.extract_strided_slice %14 {offsets = [0, 0], sizes = [24, 4], strides = [1, 1]} : vector<24x8xf32> to vector<24x4xf32>
    %cst_7 = arith.constant dense<0.000000e+00> : vector<24x128xf32>
    %16 = tpu.matmul %15, %12, %cst_7 {dimension_numbers = #tpu.dot_dimension_numbers<[1], [0], [0], [1], [0, 0, 1, 1], [], []>} : vector<24x4xf32>, vector<4x128xf32>, vector<24x128xf32> -> vector<24x128xf32>
    %17 = vector.extract_strided_slice %16 {offsets = [0, 0], sizes = [8, 128], strides = [1, 1]} : vector<24x128xf32> to vector<8x128xf32>
    %18 = vector.extract_strided_slice %16 {offsets = [8, 0], sizes = [8, 128], strides = [1, 1]} : vector<24x128xf32> to vector<8x128xf32>
    %19 = vector.extract_strided_slice %16 {offsets = [16, 0], sizes = [8, 128], strides = [1, 1]} : vector<24x128xf32> to vector<8x128xf32>
    %c3_8 = arith.constant 3 : index
    %c0_9 = arith.constant 0 : index
    %c0_10 = arith.constant 0 : index
    %20 = vector.load %arg3[%c3_8, %c0_9, %c0_10] : memref<7x8x1xf32, #tpu.memory_space<vmem>>, vector<1x8x1xf32>
    %21 = vector.shape_cast %20 : vector<1x8x1xf32> to vector<8x1xf32>
    %22 = vector.broadcast %21 : vector<8x1xf32> to vector<8x128xf32>
    %23 = arith.addf %18, %22 : vector<8x128xf32>
    %c1_i32 = arith.constant 1 : i32
    %24 = tpu.dynamic_rotate %17 by %c1_i32 dim 1 : vector<8x128xf32>, i32 -> vector<8x128xf32>
    %25 = vector.broadcast %5 : vector<1x128xf32> to vector<8x128xf32>
    %26 = arith.mulf %25, %24 : vector<8x128xf32>
    %27 = arith.addf %23, %26 : vector<8x128xf32>
    %c127_i32_11 = arith.constant 127 : i32
    %28 = tpu.dynamic_rotate %19 by %c127_i32_11 dim 1 : vector<8x128xf32>, i32 -> vector<8x128xf32>
    %29 = vector.broadcast %10 : vector<1x128xf32> to vector<8x128xf32>
    %30 = arith.mulf %29, %28 : vector<8x128xf32>
    %31 = arith.addf %27, %30 : vector<8x128xf32>
    %cst_12 = arith.constant 0.000000e+00 : f32
    %32 = vector.broadcast %cst_12 : f32 to vector<8x128xf32>
    %33 = arith.maximumf %31, %32 : vector<8x128xf32>
    %c1 = arith.constant 1 : index
    %c0_13 = arith.constant 0 : index
    %c0_14 = arith.constant 0 : index
    %34 = vector.load %arg2[%c1, %c0_13, %c0_14] : memref<7x24x8xf32, #tpu.memory_space<vmem>>, vector<1x24x8xf32>
    %35 = vector.shape_cast %34 : vector<1x24x8xf32> to vector<24x8xf32>
    %36 = vector.extract_strided_slice %35 {offsets = [0, 0], sizes = [24, 4], strides = [1, 1]} : vector<24x8xf32> to vector<24x4xf32>
    %cst_15 = arith.constant dense<0.000000e+00> : vector<24x128xf32>
    %37 = tpu.matmul %36, %12, %cst_15 {dimension_numbers = #tpu.dot_dimension_numbers<[1], [0], [0], [1], [0, 0, 1, 1], [], []>} : vector<24x4xf32>, vector<4x128xf32>, vector<24x128xf32> -> vector<24x128xf32>
    %38 = vector.extract_strided_slice %37 {offsets = [0, 0], sizes = [8, 128], strides = [1, 1]} : vector<24x128xf32> to vector<8x128xf32>
    %39 = vector.extract_strided_slice %37 {offsets = [8, 0], sizes = [8, 128], strides = [1, 1]} : vector<24x128xf32> to vector<8x128xf32>
    %40 = vector.extract_strided_slice %37 {offsets = [16, 0], sizes = [8, 128], strides = [1, 1]} : vector<24x128xf32> to vector<8x128xf32>
    %c1_16 = arith.constant 1 : index
    %c0_17 = arith.constant 0 : index
    %c0_18 = arith.constant 0 : index
    %41 = vector.load %arg3[%c1_16, %c0_17, %c0_18] : memref<7x8x1xf32, #tpu.memory_space<vmem>>, vector<1x8x1xf32>
    %42 = vector.shape_cast %41 : vector<1x8x1xf32> to vector<8x1xf32>
    %43 = vector.broadcast %42 : vector<8x1xf32> to vector<8x128xf32>
    %44 = arith.addf %39, %43 : vector<8x128xf32>
    %c1_i32_19 = arith.constant 1 : i32
    %45 = tpu.dynamic_rotate %38 by %c1_i32_19 dim 1 : vector<8x128xf32>, i32 -> vector<8x128xf32>
    %46 = vector.broadcast %5 : vector<1x128xf32> to vector<8x128xf32>
    %47 = arith.mulf %46, %45 : vector<8x128xf32>
    %48 = arith.addf %44, %47 : vector<8x128xf32>
    %c127_i32_20 = arith.constant 127 : i32
    %49 = tpu.dynamic_rotate %40 by %c127_i32_20 dim 1 : vector<8x128xf32>, i32 -> vector<8x128xf32>
    %50 = vector.broadcast %10 : vector<1x128xf32> to vector<8x128xf32>
    %51 = arith.mulf %50, %49 : vector<8x128xf32>
    %52 = arith.addf %48, %51 : vector<8x128xf32>
    %cst_21 = arith.constant 0.000000e+00 : f32
    %53 = vector.broadcast %cst_21 : f32 to vector<8x128xf32>
    %54 = arith.maximumf %52, %53 : vector<8x128xf32>
    %c4 = arith.constant 4 : index
    %c0_22 = arith.constant 0 : index
    %c0_23 = arith.constant 0 : index
    %55 = vector.load %arg2[%c4, %c0_22, %c0_23] : memref<7x24x8xf32, #tpu.memory_space<vmem>>, vector<1x24x8xf32>
    %56 = vector.shape_cast %55 : vector<1x24x8xf32> to vector<24x8xf32>
    %cst_24 = arith.constant dense<0.000000e+00> : vector<24x128xf32>
    %57 = tpu.matmul %56, %33, %cst_24 {dimension_numbers = #tpu.dot_dimension_numbers<[1], [0], [0], [1], [0, 0, 1, 1], [], []>} : vector<24x8xf32>, vector<8x128xf32>, vector<24x128xf32> -> vector<24x128xf32>
    %58 = vector.extract_strided_slice %57 {offsets = [0, 0], sizes = [8, 128], strides = [1, 1]} : vector<24x128xf32> to vector<8x128xf32>
    %59 = vector.extract_strided_slice %57 {offsets = [8, 0], sizes = [8, 128], strides = [1, 1]} : vector<24x128xf32> to vector<8x128xf32>
    %60 = vector.extract_strided_slice %57 {offsets = [16, 0], sizes = [8, 128], strides = [1, 1]} : vector<24x128xf32> to vector<8x128xf32>
    %c4_25 = arith.constant 4 : index
    %c0_26 = arith.constant 0 : index
    %c0_27 = arith.constant 0 : index
    %61 = vector.load %arg3[%c4_25, %c0_26, %c0_27] : memref<7x8x1xf32, #tpu.memory_space<vmem>>, vector<1x8x1xf32>
    %62 = vector.shape_cast %61 : vector<1x8x1xf32> to vector<8x1xf32>
    %63 = vector.broadcast %62 : vector<8x1xf32> to vector<8x128xf32>
    %64 = arith.addf %59, %63 : vector<8x128xf32>
    %c1_i32_28 = arith.constant 1 : i32
    %65 = tpu.dynamic_rotate %58 by %c1_i32_28 dim 1 : vector<8x128xf32>, i32 -> vector<8x128xf32>
    %66 = vector.broadcast %5 : vector<1x128xf32> to vector<8x128xf32>
    %67 = arith.mulf %66, %65 : vector<8x128xf32>
    %68 = arith.addf %64, %67 : vector<8x128xf32>
    %c127_i32_29 = arith.constant 127 : i32
    %69 = tpu.dynamic_rotate %60 by %c127_i32_29 dim 1 : vector<8x128xf32>, i32 -> vector<8x128xf32>
    %70 = vector.broadcast %10 : vector<1x128xf32> to vector<8x128xf32>
    %71 = arith.mulf %70, %69 : vector<8x128xf32>
    %72 = arith.addf %68, %71 : vector<8x128xf32>
    %cst_30 = arith.constant 0.000000e+00 : f32
    %73 = vector.broadcast %cst_30 : f32 to vector<8x128xf32>
    %74 = arith.maximumf %72, %73 : vector<8x128xf32>
    %75 = arith.addf %54, %74 : vector<8x128xf32>
    %cst_31 = arith.constant 5.000000e-01 : f32
    %76 = vector.broadcast %cst_31 : f32 to vector<8x128xf32>
    %77 = arith.mulf %75, %76 : vector<8x128xf32>
    %c5 = arith.constant 5 : index
    %c0_32 = arith.constant 0 : index
    %c0_33 = arith.constant 0 : index
    %78 = vector.load %arg2[%c5, %c0_32, %c0_33] : memref<7x24x8xf32, #tpu.memory_space<vmem>>, vector<1x24x8xf32>
    %79 = vector.shape_cast %78 : vector<1x24x8xf32> to vector<24x8xf32>
    %cst_34 = arith.constant dense<0.000000e+00> : vector<24x128xf32>
    %80 = tpu.matmul %79, %77, %cst_34 {dimension_numbers = #tpu.dot_dimension_numbers<[1], [0], [0], [1], [0, 0, 1, 1], [], []>} : vector<24x8xf32>, vector<8x128xf32>, vector<24x128xf32> -> vector<24x128xf32>
    %81 = vector.extract_strided_slice %80 {offsets = [0, 0], sizes = [8, 128], strides = [1, 1]} : vector<24x128xf32> to vector<8x128xf32>
    %82 = vector.extract_strided_slice %80 {offsets = [8, 0], sizes = [8, 128], strides = [1, 1]} : vector<24x128xf32> to vector<8x128xf32>
    %83 = vector.extract_strided_slice %80 {offsets = [16, 0], sizes = [8, 128], strides = [1, 1]} : vector<24x128xf32> to vector<8x128xf32>
    %c5_35 = arith.constant 5 : index
    %c0_36 = arith.constant 0 : index
    %c0_37 = arith.constant 0 : index
    %84 = vector.load %arg3[%c5_35, %c0_36, %c0_37] : memref<7x8x1xf32, #tpu.memory_space<vmem>>, vector<1x8x1xf32>
    %85 = vector.shape_cast %84 : vector<1x8x1xf32> to vector<8x1xf32>
    %86 = vector.broadcast %85 : vector<8x1xf32> to vector<8x128xf32>
    %87 = arith.addf %82, %86 : vector<8x128xf32>
    %c1_i32_38 = arith.constant 1 : i32
    %88 = tpu.dynamic_rotate %81 by %c1_i32_38 dim 1 : vector<8x128xf32>, i32 -> vector<8x128xf32>
    %89 = vector.broadcast %5 : vector<1x128xf32> to vector<8x128xf32>
    %90 = arith.mulf %89, %88 : vector<8x128xf32>
    %91 = arith.addf %87, %90 : vector<8x128xf32>
    %c127_i32_39 = arith.constant 127 : i32
    %92 = tpu.dynamic_rotate %83 by %c127_i32_39 dim 1 : vector<8x128xf32>, i32 -> vector<8x128xf32>
    %93 = vector.broadcast %10 : vector<1x128xf32> to vector<8x128xf32>
    %94 = arith.mulf %93, %92 : vector<8x128xf32>
    %95 = arith.addf %91, %94 : vector<8x128xf32>
    %cst_40 = arith.constant 0.000000e+00 : f32
    %96 = vector.broadcast %cst_40 : f32 to vector<8x128xf32>
    %97 = arith.maximumf %95, %96 : vector<8x128xf32>
    %c0_41 = arith.constant 0 : index
    %c0_42 = arith.constant 0 : index
    %c0_43 = arith.constant 0 : index
    %98 = vector.load %arg2[%c0_41, %c0_42, %c0_43] : memref<7x24x8xf32, #tpu.memory_space<vmem>>, vector<1x24x8xf32>
    %99 = vector.shape_cast %98 : vector<1x24x8xf32> to vector<24x8xf32>
    %100 = vector.extract_strided_slice %99 {offsets = [0, 0], sizes = [24, 4], strides = [1, 1]} : vector<24x8xf32> to vector<24x4xf32>
    %cst_44 = arith.constant dense<0.000000e+00> : vector<24x128xf32>
    %101 = tpu.matmul %100, %12, %cst_44 {dimension_numbers = #tpu.dot_dimension_numbers<[1], [0], [0], [1], [0, 0, 1, 1], [], []>} : vector<24x4xf32>, vector<4x128xf32>, vector<24x128xf32> -> vector<24x128xf32>
    %102 = vector.extract_strided_slice %101 {offsets = [0, 0], sizes = [8, 128], strides = [1, 1]} : vector<24x128xf32> to vector<8x128xf32>
    %103 = vector.extract_strided_slice %101 {offsets = [8, 0], sizes = [8, 128], strides = [1, 1]} : vector<24x128xf32> to vector<8x128xf32>
    %104 = vector.extract_strided_slice %101 {offsets = [16, 0], sizes = [8, 128], strides = [1, 1]} : vector<24x128xf32> to vector<8x128xf32>
    %c0_45 = arith.constant 0 : index
    %c0_46 = arith.constant 0 : index
    %c0_47 = arith.constant 0 : index
    %105 = vector.load %arg3[%c0_45, %c0_46, %c0_47] : memref<7x8x1xf32, #tpu.memory_space<vmem>>, vector<1x8x1xf32>
    %106 = vector.shape_cast %105 : vector<1x8x1xf32> to vector<8x1xf32>
    %107 = vector.broadcast %106 : vector<8x1xf32> to vector<8x128xf32>
    %108 = arith.addf %103, %107 : vector<8x128xf32>
    %c1_i32_48 = arith.constant 1 : i32
    %109 = tpu.dynamic_rotate %102 by %c1_i32_48 dim 1 : vector<8x128xf32>, i32 -> vector<8x128xf32>
    %110 = vector.broadcast %5 : vector<1x128xf32> to vector<8x128xf32>
    %111 = arith.mulf %110, %109 : vector<8x128xf32>
    %112 = arith.addf %108, %111 : vector<8x128xf32>
    %c127_i32_49 = arith.constant 127 : i32
    %113 = tpu.dynamic_rotate %104 by %c127_i32_49 dim 1 : vector<8x128xf32>, i32 -> vector<8x128xf32>
    %114 = vector.broadcast %10 : vector<1x128xf32> to vector<8x128xf32>
    %115 = arith.mulf %114, %113 : vector<8x128xf32>
    %116 = arith.addf %112, %115 : vector<8x128xf32>
    %cst_50 = arith.constant 0.000000e+00 : f32
    %117 = vector.broadcast %cst_50 : f32 to vector<8x128xf32>
    %118 = arith.maximumf %116, %117 : vector<8x128xf32>
    %c2 = arith.constant 2 : index
    %c0_51 = arith.constant 0 : index
    %c0_52 = arith.constant 0 : index
    %119 = vector.load %arg2[%c2, %c0_51, %c0_52] : memref<7x24x8xf32, #tpu.memory_space<vmem>>, vector<1x24x8xf32>
    %120 = vector.shape_cast %119 : vector<1x24x8xf32> to vector<24x8xf32>
    %cst_53 = arith.constant dense<0.000000e+00> : vector<24x128xf32>
    %121 = tpu.matmul %120, %77, %cst_53 {dimension_numbers = #tpu.dot_dimension_numbers<[1], [0], [0], [1], [0, 0, 1, 1], [], []>} : vector<24x8xf32>, vector<8x128xf32>, vector<24x128xf32> -> vector<24x128xf32>
    %122 = vector.extract_strided_slice %121 {offsets = [0, 0], sizes = [8, 128], strides = [1, 1]} : vector<24x128xf32> to vector<8x128xf32>
    %123 = vector.extract_strided_slice %121 {offsets = [8, 0], sizes = [8, 128], strides = [1, 1]} : vector<24x128xf32> to vector<8x128xf32>
    %124 = vector.extract_strided_slice %121 {offsets = [16, 0], sizes = [8, 128], strides = [1, 1]} : vector<24x128xf32> to vector<8x128xf32>
    %c2_54 = arith.constant 2 : index
    %c0_55 = arith.constant 0 : index
    %c0_56 = arith.constant 0 : index
    %125 = vector.load %arg3[%c2_54, %c0_55, %c0_56] : memref<7x8x1xf32, #tpu.memory_space<vmem>>, vector<1x8x1xf32>
    %126 = vector.shape_cast %125 : vector<1x8x1xf32> to vector<8x1xf32>
    %127 = vector.broadcast %126 : vector<8x1xf32> to vector<8x128xf32>
    %128 = arith.addf %123, %127 : vector<8x128xf32>
    %c1_i32_57 = arith.constant 1 : i32
    %129 = tpu.dynamic_rotate %122 by %c1_i32_57 dim 1 : vector<8x128xf32>, i32 -> vector<8x128xf32>
    %130 = vector.broadcast %5 : vector<1x128xf32> to vector<8x128xf32>
    %131 = arith.mulf %130, %129 : vector<8x128xf32>
    %132 = arith.addf %128, %131 : vector<8x128xf32>
    %c127_i32_58 = arith.constant 127 : i32
    %133 = tpu.dynamic_rotate %124 by %c127_i32_58 dim 1 : vector<8x128xf32>, i32 -> vector<8x128xf32>
    %134 = vector.broadcast %10 : vector<1x128xf32> to vector<8x128xf32>
    %135 = arith.mulf %134, %133 : vector<8x128xf32>
    %136 = arith.addf %132, %135 : vector<8x128xf32>
    %cst_59 = arith.constant 0.000000e+00 : f32
    %137 = vector.broadcast %cst_59 : f32 to vector<8x128xf32>
    %138 = arith.maximumf %136, %137 : vector<8x128xf32>
    %c6 = arith.constant 6 : index
    %c0_60 = arith.constant 0 : index
    %c0_61 = arith.constant 0 : index
    %139 = vector.load %arg2[%c6, %c0_60, %c0_61] : memref<7x24x8xf32, #tpu.memory_space<vmem>>, vector<1x24x8xf32>
    %140 = vector.shape_cast %139 : vector<1x24x8xf32> to vector<24x8xf32>
    %cst_62 = arith.constant dense<0.000000e+00> : vector<24x128xf32>
    %141 = tpu.matmul %140, %97, %cst_62 {dimension_numbers = #tpu.dot_dimension_numbers<[1], [0], [0], [1], [0, 0, 1, 1], [], []>} : vector<24x8xf32>, vector<8x128xf32>, vector<24x128xf32> -> vector<24x128xf32>
    %142 = vector.extract_strided_slice %141 {offsets = [0, 0], sizes = [8, 128], strides = [1, 1]} : vector<24x128xf32> to vector<8x128xf32>
    %143 = vector.extract_strided_slice %141 {offsets = [8, 0], sizes = [8, 128], strides = [1, 1]} : vector<24x128xf32> to vector<8x128xf32>
    %144 = vector.extract_strided_slice %141 {offsets = [16, 0], sizes = [8, 128], strides = [1, 1]} : vector<24x128xf32> to vector<8x128xf32>
    %c6_63 = arith.constant 6 : index
    %c0_64 = arith.constant 0 : index
    %c0_65 = arith.constant 0 : index
    %145 = vector.load %arg3[%c6_63, %c0_64, %c0_65] : memref<7x8x1xf32, #tpu.memory_space<vmem>>, vector<1x8x1xf32>
    %146 = vector.shape_cast %145 : vector<1x8x1xf32> to vector<8x1xf32>
    %147 = vector.broadcast %146 : vector<8x1xf32> to vector<8x128xf32>
    %148 = arith.addf %143, %147 : vector<8x128xf32>
    %c1_i32_66 = arith.constant 1 : i32
    %149 = tpu.dynamic_rotate %142 by %c1_i32_66 dim 1 : vector<8x128xf32>, i32 -> vector<8x128xf32>
    %150 = vector.broadcast %5 : vector<1x128xf32> to vector<8x128xf32>
    %151 = arith.mulf %150, %149 : vector<8x128xf32>
    %152 = arith.addf %148, %151 : vector<8x128xf32>
    %c127_i32_67 = arith.constant 127 : i32
    %153 = tpu.dynamic_rotate %144 by %c127_i32_67 dim 1 : vector<8x128xf32>, i32 -> vector<8x128xf32>
    %154 = vector.broadcast %10 : vector<1x128xf32> to vector<8x128xf32>
    %155 = arith.mulf %154, %153 : vector<8x128xf32>
    %156 = arith.addf %152, %155 : vector<8x128xf32>
    %cst_68 = arith.constant 0.000000e+00 : f32
    %157 = vector.broadcast %cst_68 : f32 to vector<8x128xf32>
    %158 = arith.maximumf %156, %157 : vector<8x128xf32>
    %159 = arith.addf %118, %138 : vector<8x128xf32>
    %160 = arith.addf %159, %158 : vector<8x128xf32>
    %cst_69 = arith.constant 0.333333343 : f32
    %161 = vector.broadcast %cst_69 : f32 to vector<8x128xf32>
    %162 = arith.mulf %160, %161 : vector<8x128xf32>
    %c0_70 = arith.constant 0 : index
    %c0_71 = arith.constant 0 : index
    %c0_72 = arith.constant 0 : index
    %163 = vector.load %arg4[%c0_70, %c0_71, %c0_72] : memref<1x8x128xf32, #tpu.memory_space<vmem>>, vector<1x8x128xf32>
    %164 = vector.shape_cast %163 : vector<1x8x128xf32> to vector<8x128xf32>
    %165 = vector.shape_cast %162 : vector<8x128xf32> to vector<1x8x128xf32>
    tpu.vector_store %arg4[%c0_70, %c0_71, %c0_72], %165 {strides = array<i32>} : memref<1x8x128xf32, #tpu.memory_space<vmem>>, vector<1x8x128xf32>,
    return
  }
  func.func @transform_0(%arg0: i32) -> (i32, i32, i32) {
    %c0_i32 = arith.constant 0 : i32
    %c0_i32_0 = arith.constant 0 : i32
    %c0_i32_1 = arith.constant 0 : i32
    return %arg0, %c0_i32, %c0_i32_0 : i32, i32, i32
  }
  func.func @transform_1(%arg0: i32) -> (i32, i32, i32) {
    %c0_i32 = arith.constant 0 : i32
    %c0_i32_0 = arith.constant 0 : i32
    %c0_i32_1 = arith.constant 0 : i32
    %c0_i32_2 = arith.constant 0 : i32
    return %c0_i32, %c0_i32_0, %c0_i32_1 : i32, i32, i32
  }
  func.func @transform_2(%arg0: i32) -> (i32, i32, i32) {
    %c0_i32 = arith.constant 0 : i32
    %c0_i32_0 = arith.constant 0 : i32
    %c0_i32_1 = arith.constant 0 : i32
    %c0_i32_2 = arith.constant 0 : i32
    return %c0_i32, %c0_i32_0, %c0_i32_1 : i32, i32, i32
  }
  func.func @transform_3(%arg0: i32) -> (i32, i32, i32) {
    %c0_i32 = arith.constant 0 : i32
    %c0_i32_0 = arith.constant 0 : i32
    %c0_i32_1 = arith.constant 0 : i32
    return %arg0, %c0_i32, %c0_i32_0 : i32, i32, i32
  }
}

</mosaic_0001>

<llo_original>
// kernel: tpu_custom_call.1
$region0: #{tpu_custom_call.1}
  #allocation0 [shape = 'u32[]', space=smem, size = 0x4, offset = 0x4, fixed_abs, tag = 'smem constant byte address 0x4 - core index']
  #allocation1 [shape = 'u32[144,128]{1,0:T(1,128)}', space=vmem, size = 0x12000, scoped, tag = 'internal scratch']
  %s0 = inlined_call_operand.vmem [shape: f32[2,4,128], index: 0, kind: input, shape index: {}]
  %s1 = inlined_call_operand.vmem [shape: f32[7,24,8], index: 1, kind: input, shape index: {}]
  %s2 = inlined_call_operand.vmem [shape: f32[7,8,1], index: 2, kind: input, shape index: {}]
  %s3 = inlined_call_operand.hbm [shape: f32[2,8,128], index: 3, kind: output, shape index: {}]
  %s4 = sld [smem:[#allocation0]]
  $region45: #{tpu_custom_call.1} parent=0
    _
  %s6 = ssub.s32 1, %s4
  %s7 = scalar_select 0, %s6, %s4
  $region1: #{tpu_custom_call.1} parent=0
    #allocation2 [shape = 'u8[8192]{0}', space=vmem, size = 0x2000, scoped, tag = 'output window, operand 0']
    #allocation3 [shape = 's32[2]{0}', space=sflag, size = 0x8, scoped, tag = 'scoped memory for tpu_custom_call.1']
    %8 = vsyncpa [#allocation3], 0
    %s9 = scalar_lea.sflag [#allocation3], 1
    %10 = vsyncpa %s9, 0
    loop: start=0, step=1, limit=4
    $region2: #{tpu_custom_call.1} parent=1 // loop_pre_header
      _
    $region3: #{tpu_custom_call.1} parent=1 // loop_header
      %s12 = sphi 0, %s16
      %p13 = scmp.ge.s32.totalorder %s12, 4
      %s22 = sphi 0, %s24
      %s25 = sphi 0, %s22
      %s26 = sphi 0, %s25
      %s42 = sphi 0, %s26
      %s46 = sphi 0, %s46
      %s48 = sphi 0, %s46
      %s49 = sphi 0, %s48
      %s63 = sphi 0, %s49
      %s67 = sphi 0, %s67
      %s69 = sphi 0, %s67
      %s70 = sphi 0, %s69
      %s84 = sphi 0, %s70
      %s90 = sphi 0, %s92
      %s93 = sphi 0, %s90
      %s94 = sphi 0, %s93
      %s110 = sphi 0, %s94
    $region4: #{tpu_custom_call.1} parent=1 // loop_header_branch
      %15 = sbr.rel (%p13) target = $region8
    $region5: #{tpu_custom_call.1} parent=1 // loop_body
      %s17 = ssub.s32 %s12, 1
      %s18 = ssub.s32 %s12, 2
      %s19 = sadd.s32 %s12, 1
      %s20 = ssub.s32 %s12, %s19
      %p21 = scmp.eq.s32.totalorder %s20, 0
      %s23 = sadd.s32 %s22, 1
      %s24 = scalar_select %p21, %s22, %s23
      %p27 = pneg %p21
      %p28 = scmp.eq.s32.totalorder %s12, 1
      %p29 = por %p27, %p28
      %p30 = scmp.ne.s32.totalorder %s22, %s25
      %p31 = scmp.eq.s32.totalorder %s12, 0
      %p32 = por %p30, %p31
      %p33 = scmp.ne.s32.totalorder %s22, %s25
      %p34 = scmp.eq.s32.totalorder %s17, 1
      %p35 = por %p33, %p34
      %p36 = scmp.ne.s32.totalorder %s25, %s26
      %p37 = scmp.eq.s32.totalorder %s17, 0
      %p38 = por %p36, %p37
      %p39 = scmp.ne.s32.totalorder %s25, %s26
      %p40 = scmp.eq.s32.totalorder %s18, 1
      %p41 = por %p39, %p40
      %p43 = scmp.ne.s32.totalorder %s26, %s42
      %p44 = scmp.eq.s32.totalorder %s18, 0
      %p45 = por %p43, %p44
      %s47 = sadd.s32 %s46, 1
      %p50 = scmp.eq.s32.totalorder %s12, 1
      %p51 = scmp.ne.s32.totalorder %s46, %s48
      %p52 = scmp.eq.s32.totalorder %s12, 0
      %p53 = por %p51, %p52
      %p54 = scmp.ne.s32.totalorder %s46, %s48
      %p55 = scmp.eq.s32.totalorder %s17, 1
      %p56 = por %p54, %p55
      %p57 = scmp.ne.s32.totalorder %s48, %s49
      %p58 = scmp.eq.s32.totalorder %s17, 0
      %p59 = por %p57, %p58
      %p60 = scmp.ne.s32.totalorder %s48, %s49
      %p61 = scmp.eq.s32.totalorder %s18, 1
      %p62 = por %p60, %p61
      %p64 = scmp.ne.s32.totalorder %s49, %s63
      %p65 = scmp.eq.s32.totalorder %s18, 0
      %p66 = por %p64, %p65
      %s68 = sadd.s32 %s67, 1
      %p71 = scmp.eq.s32.totalorder %s12, 1
      %p72 = scmp.ne.s32.totalorder %s67, %s69
      %p73 = scmp.eq.s32.totalorder %s12, 0
      %p74 = por %p72, %p73
      %p75 = scmp.ne.s32.totalorder %s67, %s69
      %p76 = scmp.eq.s32.totalorder %s17, 1
      %p77 = por %p75, %p76
      %p78 = scmp.ne.s32.totalorder %s69, %s70
      %p79 = scmp.eq.s32.totalorder %s17, 0
      %p80 = por %p78, %p79
      %p81 = scmp.ne.s32.totalorder %s69, %s70
      %p82 = scmp.eq.s32.totalorder %s18, 1
      %p83 = por %p81, %p82
      %p85 = scmp.ne.s32.totalorder %s70, %s84
      %p86 = scmp.eq.s32.totalorder %s18, 0
      %p87 = por %p85, %p86
      %s88 = ssub.s32 %s12, %s19
      %p89 = scmp.eq.s32.totalorder %s88, 0
      %s91 = sadd.s32 %s90, 1
      %s92 = scalar_select %p89, %s90, %s91
      %p95 = pneg %p89
      %p96 = scmp.eq.s32.totalorder %s12, 1
      %p97 = por %p95, %p96
      %p98 = scmp.ne.s32.totalorder %s90, %s93
      %p99 = scmp.eq.s32.totalorder %s12, 0
      %p100 = por %p98, %p99
      %p101 = scmp.ne.s32.totalorder %s90, %s93
      %p102 = scmp.eq.s32.totalorder %s17, 1
      %p103 = por %p101, %p102
      %p104 = scmp.ne.s32.totalorder %s93, %s94
      %p105 = scmp.eq.s32.totalorder %s17, 0
      %p106 = por %p104, %p105
      %p107 = scmp.ne.s32.totalorder %s93, %s94
      %p108 = scmp.eq.s32.totalorder %s18, 1
      %p109 = por %p107, %p108
      %p111 = scmp.ne.s32.totalorder %s94, %s110
      %p112 = scmp.eq.s32.totalorder %s18, 0
      %p113 = por %p111, %p112
      %p114 = scmp.le.s32.totalorder 1, %s12
      %p115 = scmp.lt.s32.totalorder %s12, 3
      %p116 = pnand %p114, %p115
      %p117 = pneg %p116
      // Predicated region
      $region9: #{tpu_custom_call.1} parent=5 // pred_check
        _
      $region10: #{tpu_custom_call.1} parent=5 // pred_check_branch
        %119 = sbr.rel (%p116) target = $region12
      $region11: #{tpu_custom_call.1} parent=5 // pred_region
        %s120 = ssub.s32 %s12, 1
        // Predicated region
        $region13: #{tpu_custom_call.1} parent=11 // pred_check
          %p121 = pneg %p59
        $region14: #{tpu_custom_call.1} parent=11 // pred_check_branch
          %123 = sbr.rel (%p121) target = $region16
        $region15: #{tpu_custom_call.1} parent=11 // pred_region
          _
        $region16: #{tpu_custom_call.1} parent=11 // pred_fallthru
          _
        // Predicated region
        $region17: #{tpu_custom_call.1} parent=11 // pred_check
          %p124 = pneg %p80
        $region18: #{tpu_custom_call.1} parent=11 // pred_check_branch
          %126 = sbr.rel (%p124) target = $region20
        $region19: #{tpu_custom_call.1} parent=11 // pred_region
          _
        $region20: #{tpu_custom_call.1} parent=11 // pred_fallthru
          _
      $region12: #{tpu_custom_call.1} parent=5 // pred_fallthru
        _
      %p127 = scmp.lt.s32.totalorder %s12, 2
      // Predicated region
      $region21: #{tpu_custom_call.1} parent=5 // pred_check
        %p128 = pneg %p127
      $region22: #{tpu_custom_call.1} parent=5 // pred_check_branch
        %130 = sbr.rel (%p128) target = $region24
      $region23: #{tpu_custom_call.1} parent=5 // pred_region
        // Predicated region
        $region25: #{tpu_custom_call.1} parent=23 // pred_check
          %p131 = pneg %p32
        $region26: #{tpu_custom_call.1} parent=23 // pred_check_branch
          %133 = sbr.rel (%p131) target = $region28
        $region27: #{tpu_custom_call.1} parent=23 // pred_region
          %p134 = scmp.lt.s32.totalorder %s12, 1
          %s135 = scalar_select %p134, %s12, 1
          %s136 = smul.addr %s135, 4
          %s137 = scalar_lea.vmem %s0, %s136
        $region28: #{tpu_custom_call.1} parent=23 // pred_fallthru
          _
      $region24: #{tpu_custom_call.1} parent=5 // pred_fallthru
        _
      %p138 = scmp.le.s32.totalorder 1, %s12
      %p139 = scmp.lt.s32.totalorder %s12, 3
      %p140 = pnand %p138, %p139
      %p141 = pneg %p140
      // Predicated region
      $region29: #{tpu_custom_call.1} parent=5 // pred_check
        _
      $region30: #{tpu_custom_call.1} parent=5 // pred_check_branch
        %143 = sbr.rel (%p140) target = $region32
      $region31: #{tpu_custom_call.1} parent=5 // pred_region
        %s144 = ssub.s32 %s12, 1
        %p145 = scmp.lt.s32.totalorder %s17, 1
        %s146 = scalar_select %p145, %s17, 1
        %s147 = smul.addr %s146, 4
        %s148 = scalar_lea.vmem %s0, %s147
        %p149 = pneg %p38
        %p150 = pneg %p35
        %p151 = pneg %p59
        %p152 = pneg %p56
        %p153 = pneg %p80
        %p154 = pneg %p77
        %p155 = pneg %p106
        %p156 = pneg %p103
        %s157 = sand.u32 %s93, 1
        %s158 = scalar_lea.sflag [#allocation3], %s157
        %s159 = sand.u32 %s93, 1
        %s160 = smul.addr %s159, 8
        %s161 = scalar_lea.vmem [#allocation2], %s160
        %p162 = scmp.lt.s32.totalorder %s17, 1
        %s163 = scalar_select %p162, %s17, 1
        %s164 = smul.addr %s163, 4
        %s165 = scalar_lea.vmem %s0, %s164
        %v166 = vlaneseq
        %v167 = vand.u32 %v166, 127
        %vm168 = vcmp.ne.s32.totalorder %v167, 0
        %v169 = vsel %vm168, 1.0, 0.0
        %vm170 = vcmp.ne.s32.totalorder %v167, 127
        %v171 = vsel %vm170, 1.0, 0.0
        %v172 = vld [vmem:[%s165] sm:$0xf]
        %s173 = scalar_lea.vmem %s1, 72
        %v174 = vld [vmem:[%s173] sm:$0xff]
        %v175 = vld [vmem:[%s173 + $0x8] sm:$0xff]
        %v176 = vld [vmem:[%s173 + $0x10] sm:$0xff]
        %vm177 = vcmask 31744
        %v179 = vsel %vm177, %v174, 0
        %v182 = vsel %vm177, %v175, 0
        %v185 = vsel %vm177, %v176, 0
        %vm187 = vcmask 1043456
        %v189 = vsel %vm187, %v172, 0
        %191 = vmatprep.subr.mxu0 0.0
        %192 = vmatpush1.msra.mxu0 %v189
        %193 = vmatprep.subr.mxu0 0.0
        %194 = vmatpush1.msra.mxu0 0.0
        %195 = vmatprep.subr.mxu0 0.0
        %196 = vmatpush1.msra.mxu0 0.0
        %197 = vmatprep.subr.mxu0 0.0
        %198 = vmatpush1.msra.mxu0 0.0
        %199 = vmatprep.subr.mxu0 0.0
        %200 = vmatpush1.msra.mxu0 0.0
        %201 = vmatprep.subr.mxu0 0.0
        %202 = vmatpush1.msra.mxu0 0.0
        %203 = vmatprep.subr.mxu0 0.0
        %204 = vmatpush1.msra.mxu0 0.0
        %205 = vmatprep.subr.mxu0 0.0
        %206 = vmatpush1.msra.mxu0 0.0
        %207 = vmatprep.subr.mxu0 0.0
        %208 = vmatpush1.msra.mxu0 0.0
        %209 = vmatprep.subr.mxu0 0.0
        %210 = vmatpush1.msra.mxu0 0.0
        %211 = vmatprep.subr.mxu0 0.0
        %212 = vmatpush1.msra.mxu0 0.0
        %213 = vmatprep.subr.mxu0 0.0
        %214 = vmatpush1.msra.mxu0 0.0
        %215 = vmatprep.subr.mxu0 0.0
        %216 = vmatpush1.msra.mxu0 0.0
        %217 = vmatprep.subr.mxu0 0.0
        %218 = vmatpush1.msra.mxu0 0.0
        %219 = vmatprep.subr.mxu0 0.0
        %220 = vmatpush1.msra.mxu0 0.0
        %221 = vmatprep.subr.mxu0 0.0
        %222 = vmatpush1.msra.mxu0 0.0
        %223 = vmatprep.subr.mxu0 0.0
        %224 = vmatpush1.msra.mxu0 0.0
        %225 = vmatprep.subr.mxu0 0.0
        %226 = vmatpush1.msra.mxu0 0.0
        %227 = vmatprep.subr.mxu0 0.0
        %228 = vmatpush1.msra.mxu0 0.0
        %229 = vmatprep.subr.mxu0 0.0
        %230 = vmatpush1.msra.mxu0 0.0
        %231 = vmatprep.subr.mxu0 0.0
        %232 = vmatpush1.msra.mxu0 0.0
        %233 = vmatprep.subr.mxu0 0.0
        %234 = vmatpush1.msra.mxu0 0.0
        %235 = vmatprep.subr.mxu0 0.0
        %236 = vmatpush1.msra.mxu0 0.0
        %237 = vmatprep.subr.mxu0 0.0
        %238 = vmatpush1.msra.mxu0 0.0
        %239 = vmatprep.subr.mxu0 0.0
        %240 = vmatpush1.msra.mxu0 0.0
        %241 = vmatprep.subr.mxu0 0.0
        %242 = vmatpush1.msra.mxu0 0.0
        %243 = vmatprep.subr.mxu0 0.0
        %244 = vmatpush1.msra.mxu0 0.0
        %245 = vmatprep.subr.mxu0 0.0
        %246 = vmatpush1.msra.mxu0 0.0
        %247 = vmatprep.subr.mxu0 0.0
        %248 = vmatpush1.msra.mxu0 0.0
        %249 = vmatprep.subr.mxu0 0.0
        %250 = vmatpush1.msra.mxu0 0.0
        %251 = vmatprep.subr.mxu0 0.0
        %252 = vmatpush1.msra.mxu0 0.0
        %253 = vmatprep.subr.mxu0 0.0
        %254 = vmatpush1.msra.mxu0 0.0
        %255 = vmatprep.mubr.f32.mxu0 0.0
        %256 = vmatmul.mubr.f32.gmra.mrb[0].mxu0 %v179
        %v257 = vpop.f32.mrb[0].mxu0
        %v258 = vadd.f32 0.0, %v257
        %v259 = vpop.f32.mrb[0].mxu0
        %260 = vmatprep.mubr.f32.mxu0 0.0
        %261 = vmatmul.mubr.f32.gmra.mrb[0].mxu0 %v182
        %v262 = vpop.f32.mrb[0].mxu0
        %v263 = vadd.f32 0.0, %v262
        %v264 = vpop.f32.mrb[0].mxu0
        %265 = vmatprep.mubr.f32.mxu0 0.0
        %266 = vmatmul.mubr.f32.gmra.mrb[0].mxu0 %v185
        %v267 = vpop.f32.mrb[0].mxu0
        %v268 = vadd.f32 0.0, %v267
        %v269 = vpop.f32.mrb[0].mxu0
        %270 = vdwg.mxu0
        %s271 = scalar_lea.vmem %s2, 24
        %v272 = vld [vmem:[%s271] sm:$0xff]
        %274 = vset.pattern.permute.xlu0 0
        %275 = vperm.xlu0 %274, %v272
        %v276 = vpop.permute.xlu0 %275
        %v278 = vadd.f32 %v263, %v276
        %279 = vrot.lane.b32.xlu0 %v258, 1
        %v280 = vpop.permute.xlu0 %279
        %v281 = vmul.f32 %v169, %v280
        %v282 = vadd.f32 %v278, %v281
        %283 = vrot.lane.b32.xlu0 %v268, 127
        %v284 = vpop.permute.xlu0 %283
        %v285 = vmul.f32 %v171, %v284
        %v286 = vadd.f32 %v282, %v285
        %v287 = vmax.f32 %v286, 0.0
        %s288 = scalar_lea.vmem %s1, 24
        %v289 = vld [vmem:[%s288] sm:$0xff]
        %v290 = vld [vmem:[%s288 + $0x8] sm:$0xff]
        %v291 = vld [vmem:[%s288 + $0x10] sm:$0xff]
        %v293 = vsel %vm177, %v289, 0
        %v296 = vsel %vm177, %v290, 0
        %v299 = vsel %vm177, %v291, 0
        %301 = vmatprep.subr.mxu0 0.0
        %302 = vmatpush1.msra.mxu0 %v189
        %303 = vmatprep.subr.mxu0 0.0
        %304 = vmatpush1.msra.mxu0 0.0
        %305 = vmatprep.subr.mxu0 0.0
        %306 = vmatpush1.msra.mxu0 0.0
        %307 = vmatprep.subr.mxu0 0.0
        %308 = vmatpush1.msra.mxu0 0.0
        %309 = vmatprep.subr.mxu0 0.0
        %310 = vmatpush1.msra.mxu0 0.0
        %311 = vmatprep.subr.mxu0 0.0
        %312 = vmatpush1.msra.mxu0 0.0
        %313 = vmatprep.subr.mxu0 0.0
        %314 = vmatpush1.msra.mxu0 0.0
        %315 = vmatprep.subr.mxu0 0.0
        %316 = vmatpush1.msra.mxu0 0.0
        %317 = vmatprep.subr.mxu0 0.0
        %318 = vmatpush1.msra.mxu0 0.0
        %319 = vmatprep.subr.mxu0 0.0
        %320 = vmatpush1.msra.mxu0 0.0
        %321 = vmatprep.subr.mxu0 0.0
        %322 = vmatpush1.msra.mxu0 0.0
        %323 = vmatprep.subr.mxu0 0.0
        %324 = vmatpush1.msra.mxu0 0.0
        %325 = vmatprep.subr.mxu0 0.0
        %326 = vmatpush1.msra.mxu0 0.0
        %327 = vmatprep.subr.mxu0 0.0
        %328 = vmatpush1.msra.mxu0 0.0
        %329 = vmatprep.subr.mxu0 0.0
        %330 = vmatpush1.msra.mxu0 0.0
        %331 = vmatprep.subr.mxu0 0.0
        %332 = vmatpush1.msra.mxu0 0.0
        %333 = vmatprep.subr.mxu0 0.0
        %334 = vmatpush1.msra.mxu0 0.0
        %335 = vmatprep.subr.mxu0 0.0
        %336 = vmatpush1.msra.mxu0 0.0
        %337 = vmatprep.subr.mxu0 0.0
        %338 = vmatpush1.msra.mxu0 0.0
        %339 = vmatprep.subr.mxu0 0.0
        %340 = vmatpush1.msra.mxu0 0.0
        %341 = vmatprep.subr.mxu0 0.0
        %342 = vmatpush1.msra.mxu0 0.0
        %343 = vmatprep.subr.mxu0 0.0
        %344 = vmatpush1.msra.mxu0 0.0
        %345 = vmatprep.subr.mxu0 0.0
        %346 = vmatpush1.msra.mxu0 0.0
        %347 = vmatprep.subr.mxu0 0.0
        %348 = vmatpush1.msra.mxu0 0.0
        %349 = vmatprep.subr.mxu0 0.0
        %350 = vmatpush1.msra.mxu0 0.0
        %351 = vmatprep.subr.mxu0 0.0
        %352 = vmatpush1.msra.mxu0 0.0
        %353 = vmatprep.subr.mxu0 0.0
        %354 = vmatpush1.msra.mxu0 0.0
        %355 = vmatprep.subr.mxu0 0.0
        %356 = vmatpush1.msra.mxu0 0.0
        %357 = vmatprep.subr.mxu0 0.0
        %358 = vmatpush1.msra.mxu0 0.0
        %359 = vmatprep.subr.mxu0 0.0
        %360 = vmatpush1.msra.mxu0 0.0
        %361 = vmatprep.subr.mxu0 0.0
        %362 = vmatpush1.msra.mxu0 0.0
        %363 = vmatprep.subr.mxu0 0.0
        %364 = vmatpush1.msra.mxu0 0.0
        %365 = vmatprep.mubr.f32.mxu0 0.0
        %366 = vmatmul.mubr.f32.gmra.mrb[0].mxu0 %v293
        %v367 = vpop.f32.mrb[0].mxu0
        %v368 = vadd.f32 0.0, %v367
        %v369 = vpop.f32.mrb[0].mxu0
        %370 = vmatprep.mubr.f32.mxu0 0.0
        %371 = vmatmul.mubr.f32.gmra.mrb[0].mxu0 %v296
        %v372 = vpop.f32.mrb[0].mxu0
        %v373 = vadd.f32 0.0, %v372
        %v374 = vpop.f32.mrb[0].mxu0
        %375 = vmatprep.mubr.f32.mxu0 0.0
        %376 = vmatmul.mubr.f32.gmra.mrb[0].mxu0 %v299
        %v377 = vpop.f32.mrb[0].mxu0
        %v378 = vadd.f32 0.0, %v377
        %v379 = vpop.f32.mrb[0].mxu0
        %380 = vdwg.mxu0
        %s381 = scalar_lea.vmem %s2, 8
        %v382 = vld [vmem:[%s381] sm:$0xff]
        %384 = vset.pattern.permute.xlu0 0
        %385 = vperm.xlu0 %384, %v382
        %v386 = vpop.permute.xlu0 %385
        %v388 = vadd.f32 %v373, %v386
        %389 = vrot.lane.b32.xlu0 %v368, 1
        %v390 = vpop.permute.xlu0 %389
        %v391 = vmul.f32 %v169, %v390
        %v392 = vadd.f32 %v388, %v391
        %393 = vrot.lane.b32.xlu0 %v378, 127
        %v394 = vpop.permute.xlu0 %393
        %v395 = vmul.f32 %v171, %v394
        %v396 = vadd.f32 %v392, %v395
        %v397 = vmax.f32 %v396, 0.0
        %s398 = scalar_lea.vmem %s1, 96
        %v399 = vld [vmem:[%s398] sm:$0xff]
        %v400 = vld [vmem:[%s398 + $0x8] sm:$0xff]
        %v401 = vld [vmem:[%s398 + $0x10] sm:$0xff]
        %vm402 = vcmask 64512
        %v404 = vsel %vm402, %v399, 0
        %v407 = vsel %vm402, %v400, 0
        %v410 = vsel %vm402, %v401, 0
        %412 = vmatprep.subr.mxu0 0.0
        %413 = vmatpush1.msra.mxu0 %v287
        %414 = vmatprep.subr.mxu0 0.0
        %415 = vmatpush1.msra.mxu0 0.0
        %416 = vmatprep.subr.mxu0 0.0
        %417 = vmatpush1.msra.mxu0 0.0
        %418 = vmatprep.subr.mxu0 0.0
        %419 = vmatpush1.msra.mxu0 0.0
        %420 = vmatprep.subr.mxu0 0.0
        %421 = vmatpush1.msra.mxu0 0.0
        %422 = vmatprep.subr.mxu0 0.0
        %423 = vmatpush1.msra.mxu0 0.0
        %424 = vmatprep.subr.mxu0 0.0
        %425 = vmatpush1.msra.mxu0 0.0
        %426 = vmatprep.subr.mxu0 0.0
        %427 = vmatpush1.msra.mxu0 0.0
        %428 = vmatprep.subr.mxu0 0.0
        %429 = vmatpush1.msra.mxu0 0.0
        %430 = vmatprep.subr.mxu0 0.0
        %431 = vmatpush1.msra.mxu0 0.0
        %432 = vmatprep.subr.mxu0 0.0
        %433 = vmatpush1.msra.mxu0 0.0
        %434 = vmatprep.subr.mxu0 0.0
        %435 = vmatpush1.msra.mxu0 0.0
        %436 = vmatprep.subr.mxu0 0.0
        %437 = vmatpush1.msra.mxu0 0.0
        %438 = vmatprep.subr.mxu0 0.0
        %439 = vmatpush1.msra.mxu0 0.0
        %440 = vmatprep.subr.mxu0 0.0
        %441 = vmatpush1.msra.mxu0 0.0
        %442 = vmatprep.subr.mxu0 0.0
        %443 = vmatpush1.msra.mxu0 0.0
        %444 = vmatprep.subr.mxu0 0.0
        %445 = vmatpush1.msra.mxu0 0.0
        %446 = vmatprep.subr.mxu0 0.0
        %447 = vmatpush1.msra.mxu0 0.0
        %448 = vmatprep.subr.mxu0 0.0
        %449 = vmatpush1.msra.mxu0 0.0
        %450 = vmatprep.subr.mxu0 0.0
        %451 = vmatpush1.msra.mxu0 0.0
        %452 = vmatprep.subr.mxu0 0.0
        %453 = vmatpush1.msra.mxu0 0.0
        %454 = vmatprep.subr.mxu0 0.0
        %455 = vmatpush1.msra.mxu0 0.0
        %456 = vmatprep.subr.mxu0 0.0
        %457 = vmatpush1.msra.mxu0 0.0
        %458 = vmatprep.subr.mxu0 0.0
        %459 = vmatpush1.msra.mxu0 0.0
        %460 = vmatprep.subr.mxu0 0.0
        %461 = vmatpush1.msra.mxu0 0.0
        %462 = vmatprep.subr.mxu0 0.0
        %463 = vmatpush1.msra.mxu0 0.0
        %464 = vmatprep.subr.mxu0 0.0
        %465 = vmatpush1.msra.mxu0 0.0
        %466 = vmatprep.subr.mxu0 0.0
        %467 = vmatpush1.msra.mxu0 0.0
        %468 = vmatprep.subr.mxu0 0.0
        %469 = vmatpush1.msra.mxu0 0.0
        %470 = vmatprep.subr.mxu0 0.0
        %471 = vmatpush1.msra.mxu0 0.0
        %472 = vmatprep.subr.mxu0 0.0
        %473 = vmatpush1.msra.mxu0 0.0
        %474 = vmatprep.subr.mxu0 0.0
        %475 = vmatpush1.msra.mxu0 0.0
        %476 = vmatprep.mubr.f32.mxu0 0.0
        %477 = vmatmul.mubr.f32.gmra.mrb[0].mxu0 %v404
        %v478 = vpop.f32.mrb[0].mxu0
        %v479 = vadd.f32 0.0, %v478
        %v480 = vpop.f32.mrb[0].mxu0
        %481 = vmatprep.mubr.f32.mxu0 0.0
        %482 = vmatmul.mubr.f32.gmra.mrb[0].mxu0 %v407
        %v483 = vpop.f32.mrb[0].mxu0
        %v484 = vadd.f32 0.0, %v483
        %v485 = vpop.f32.mrb[0].mxu0
        %486 = vmatprep.mubr.f32.mxu0 0.0
        %487 = vmatmul.mubr.f32.gmra.mrb[0].mxu0 %v410
        %v488 = vpop.f32.mrb[0].mxu0
        %v489 = vadd.f32 0.0, %v488
        %v490 = vpop.f32.mrb[0].mxu0
        %491 = vdwg.mxu0
        %s492 = scalar_lea.vmem %s2, 32
        %v493 = vld [vmem:[%s492] sm:$0xff]
        %495 = vset.pattern.permute.xlu0 0
        %496 = vperm.xlu0 %495, %v493
        %v497 = vpop.permute.xlu0 %496
        %v499 = vadd.f32 %v484, %v497
        %500 = vrot.lane.b32.xlu0 %v479, 1
        %v501 = vpop.permute.xlu0 %500
        %v502 = vmul.f32 %v169, %v501
        %v503 = vadd.f32 %v499, %v502
        %504 = vrot.lane.b32.xlu0 %v489, 127
        %v505 = vpop.permute.xlu0 %504
        %v506 = vmul.f32 %v171, %v505
        %v507 = vadd.f32 %v503, %v506
        %v508 = vmax.f32 %v507, 0.0
        %v509 = vadd.f32 %v397, %v508
        %v510 = vmul.f32 %v509, 0.5
        %s511 = scalar_lea.vmem %s1, 120
        %v512 = vld [vmem:[%s511] sm:$0xff]
        %v513 = vld [vmem:[%s511 + $0x8] sm:$0xff]
        %v514 = vld [vmem:[%s511 + $0x10] sm:$0xff]
        %v516 = vsel %vm402, %v512, 0
        %v519 = vsel %vm402, %v513, 0
        %v522 = vsel %vm402, %v514, 0
        %524 = vmatprep.subr.mxu0 0.0
        %525 = vmatpush1.msra.mxu0 %v510
        %526 = vmatprep.subr.mxu0 0.0
        %527 = vmatpush1.msra.mxu0 0.0
        %528 = vmatprep.subr.mxu0 0.0
        %529 = vmatpush1.msra.mxu0 0.0
        %530 = vmatprep.subr.mxu0 0.0
        %531 = vmatpush1.msra.mxu0 0.0
        %532 = vmatprep.subr.mxu0 0.0
        %533 = vmatpush1.msra.mxu0 0.0
        %534 = vmatprep.subr.mxu0 0.0
        %535 = vmatpush1.msra.mxu0 0.0
        %536 = vmatprep.subr.mxu0 0.0
        %537 = vmatpush1.msra.mxu0 0.0
        %538 = vmatprep.subr.mxu0 0.0
        %539 = vmatpush1.msra.mxu0 0.0
        %540 = vmatprep.subr.mxu0 0.0
        %541 = vmatpush1.msra.mxu0 0.0
        %542 = vmatprep.subr.mxu0 0.0
        %543 = vmatpush1.msra.mxu0 0.0
        %544 = vmatprep.subr.mxu0 0.0
        %545 = vmatpush1.msra.mxu0 0.0
        %546 = vmatprep.subr.mxu0 0.0
        %547 = vmatpush1.msra.mxu0 0.0
        %548 = vmatprep.subr.mxu0 0.0
        %549 = vmatpush1.msra.mxu0 0.0
        %550 = vmatprep.subr.mxu0 0.0
        %551 = vmatpush1.msra.mxu0 0.0
        %552 = vmatprep.subr.mxu0 0.0
        %553 = vmatpush1.msra.mxu0 0.0
        %554 = vmatprep.subr.mxu0 0.0
        %555 = vmatpush1.msra.mxu0 0.0
        %556 = vmatprep.subr.mxu0 0.0
        %557 = vmatpush1.msra.mxu0 0.0
        %558 = vmatprep.subr.mxu0 0.0
        %559 = vmatpush1.msra.mxu0 0.0
        %560 = vmatprep.subr.mxu0 0.0
        %561 = vmatpush1.msra.mxu0 0.0
        %562 = vmatprep.subr.mxu0 0.0
        %563 = vmatpush1.msra.mxu0 0.0
        %564 = vmatprep.subr.mxu0 0.0
        %565 = vmatpush1.msra.mxu0 0.0
        %566 = vmatprep.subr.mxu0 0.0
        %567 = vmatpush1.msra.mxu0 0.0
        %568 = vmatprep.subr.mxu0 0.0
        %569 = vmatpush1.msra.mxu0 0.0
        %570 = vmatprep.subr.mxu0 0.0
        %571 = vmatpush1.msra.mxu0 0.0
        %572 = vmatprep.subr.mxu0 0.0
        %573 = vmatpush1.msra.mxu0 0.0
        %574 = vmatprep.subr.mxu0 0.0
        %575 = vmatpush1.msra.mxu0 0.0
        %576 = vmatprep.subr.mxu0 0.0
        %577 = vmatpush1.msra.mxu0 0.0
        %578 = vmatprep.subr.mxu0 0.0
        %579 = vmatpush1.msra.mxu0 0.0
        %580 = vmatprep.subr.mxu0 0.0
        %581 = vmatpush1.msra.mxu0 0.0
        %582 = vmatprep.subr.mxu0 0.0
        %583 = vmatpush1.msra.mxu0 0.0
        %584 = vmatprep.subr.mxu0 0.0
        %585 = vmatpush1.msra.mxu0 0.0
        %586 = vmatprep.subr.mxu0 0.0
        %587 = vmatpush1.msra.mxu0 0.0
        %588 = vmatprep.mubr.f32.mxu0 0.0
        %589 = vmatmul.mubr.f32.gmra.mrb[0].mxu0 %v516
        %v590 = vpop.f32.mrb[0].mxu0
        %v591 = vadd.f32 0.0, %v590
        %v592 = vpop.f32.mrb[0].mxu0
        %593 = vmatprep.mubr.f32.mxu0 0.0
        %594 = vmatmul.mubr.f32.gmra.mrb[0].mxu0 %v519
        %v595 = vpop.f32.mrb[0].mxu0
        %v596 = vadd.f32 0.0, %v595
        %v597 = vpop.f32.mrb[0].mxu0
        %598 = vmatprep.mubr.f32.mxu0 0.0
        %599 = vmatmul.mubr.f32.gmra.mrb[0].mxu0 %v522
        %v600 = vpop.f32.mrb[0].mxu0
        %v601 = vadd.f32 0.0, %v600
        %v602 = vpop.f32.mrb[0].mxu0
        %603 = vdwg.mxu0
        %s604 = scalar_lea.vmem %s2, 40
        %v605 = vld [vmem:[%s604] sm:$0xff]
        %607 = vset.pattern.permute.xlu0 0
        %608 = vperm.xlu0 %607, %v605
        %v609 = vpop.permute.xlu0 %608
        %v611 = vadd.f32 %v596, %v609
        %612 = vrot.lane.b32.xlu0 %v591, 1
        %v613 = vpop.permute.xlu0 %612
        %v614 = vmul.f32 %v169, %v613
        %v615 = vadd.f32 %v611, %v614
        %616 = vrot.lane.b32.xlu0 %v601, 127
        %v617 = vpop.permute.xlu0 %616
        %v618 = vmul.f32 %v171, %v617
        %v619 = vadd.f32 %v615, %v618
        %v620 = vmax.f32 %v619, 0.0
        %v621 = vld [vmem:[%s1] sm:$0xff]
        %v622 = vld [vmem:[%s1 + $0x8] sm:$0xff]
        %v623 = vld [vmem:[%s1 + $0x10] sm:$0xff]
        %v625 = vsel %vm177, %v621, 0
        %v628 = vsel %vm177, %v622, 0
        %v631 = vsel %vm177, %v623, 0
        %633 = vmatprep.subr.mxu0 0.0
        %634 = vmatpush1.msra.mxu0 %v189
        %635 = vmatprep.subr.mxu0 0.0
        %636 = vmatpush1.msra.mxu0 0.0
        %637 = vmatprep.subr.mxu0 0.0
        %638 = vmatpush1.msra.mxu0 0.0
        %639 = vmatprep.subr.mxu0 0.0
        %640 = vmatpush1.msra.mxu0 0.0
        %641 = vmatprep.subr.mxu0 0.0
        %642 = vmatpush1.msra.mxu0 0.0
        %643 = vmatprep.subr.mxu0 0.0
        %644 = vmatpush1.msra.mxu0 0.0
        %645 = vmatprep.subr.mxu0 0.0
        %646 = vmatpush1.msra.mxu0 0.0
        %647 = vmatprep.subr.mxu0 0.0
        %648 = vmatpush1.msra.mxu0 0.0
        %649 = vmatprep.subr.mxu0 0.0
        %650 = vmatpush1.msra.mxu0 0.0
        %651 = vmatprep.subr.mxu0 0.0
        %652 = vmatpush1.msra.mxu0 0.0
        %653 = vmatprep.subr.mxu0 0.0
        %654 = vmatpush1.msra.mxu0 0.0
        %655 = vmatprep.subr.mxu0 0.0
        %656 = vmatpush1.msra.mxu0 0.0
        %657 = vmatprep.subr.mxu0 0.0
        %658 = vmatpush1.msra.mxu0 0.0
        %659 = vmatprep.subr.mxu0 0.0
        %660 = vmatpush1.msra.mxu0 0.0
        %661 = vmatprep.subr.mxu0 0.0
        %662 = vmatpush1.msra.mxu0 0.0
        %663 = vmatprep.subr.mxu0 0.0
        %664 = vmatpush1.msra.mxu0 0.0
        %665 = vmatprep.subr.mxu0 0.0
        %666 = vmatpush1.msra.mxu0 0.0
        %667 = vmatprep.subr.mxu0 0.0
        %668 = vmatpush1.msra.mxu0 0.0
        %669 = vmatprep.subr.mxu0 0.0
        %670 = vmatpush1.msra.mxu0 0.0
        %671 = vmatprep.subr.mxu0 0.0
        %672 = vmatpush1.msra.mxu0 0.0
        %673 = vmatprep.subr.mxu0 0.0
        %674 = vmatpush1.msra.mxu0 0.0
        %675 = vmatprep.subr.mxu0 0.0
        %676 = vmatpush1.msra.mxu0 0.0
        %677 = vmatprep.subr.mxu0 0.0
        %678 = vmatpush1.msra.mxu0 0.0
        %679 = vmatprep.subr.mxu0 0.0
        %680 = vmatpush1.msra.mxu0 0.0
        %681 = vmatprep.subr.mxu0 0.0
        %682 = vmatpush1.msra.mxu0 0.0
        %683 = vmatprep.subr.mxu0 0.0
        %684 = vmatpush1.msra.mxu0 0.0
        %685 = vmatprep.subr.mxu0 0.0
        %686 = vmatpush1.msra.mxu0 0.0
        %687 = vmatprep.subr.mxu0 0.0
        %688 = vmatpush1.msra.mxu0 0.0
        %689 = vmatprep.subr.mxu0 0.0
        %690 = vmatpush1.msra.mxu0 0.0
        %691 = vmatprep.subr.mxu0 0.0
        %692 = vmatpush1.msra.mxu0 0.0
        %693 = vmatprep.subr.mxu0 0.0
        %694 = vmatpush1.msra.mxu0 0.0
        %695 = vmatprep.subr.mxu0 0.0
        %696 = vmatpush1.msra.mxu0 0.0
        %697 = vmatprep.mubr.f32.mxu0 0.0
        %698 = vmatmul.mubr.f32.gmra.mrb[0].mxu0 %v625
        %v699 = vpop.f32.mrb[0].mxu0
        %v700 = vadd.f32 0.0, %v699
        %v701 = vpop.f32.mrb[0].mxu0
        %702 = vmatprep.mubr.f32.mxu0 0.0
        %703 = vmatmul.mubr.f32.gmra.mrb[0].mxu0 %v628
        %v704 = vpop.f32.mrb[0].mxu0
        %v705 = vadd.f32 0.0, %v704
        %v706 = vpop.f32.mrb[0].mxu0
        %707 = vmatprep.mubr.f32.mxu0 0.0
        %708 = vmatmul.mubr.f32.gmra.mrb[0].mxu0 %v631
        %v709 = vpop.f32.mrb[0].mxu0
        %v710 = vadd.f32 0.0, %v709
        %v711 = vpop.f32.mrb[0].mxu0
        %712 = vdwg.mxu0
        %v713 = vld [vmem:[%s2] sm:$0xff]
        %715 = vset.pattern.permute.xlu0 0
        %716 = vperm.xlu0 %715, %v713
        %v717 = vpop.permute.xlu0 %716
        %v719 = vadd.f32 %v705, %v717
        %720 = vrot.lane.b32.xlu0 %v700, 1
        %v721 = vpop.permute.xlu0 %720
        %v722 = vmul.f32 %v169, %v721
        %v723 = vadd.f32 %v719, %v722
        %724 = vrot.lane.b32.xlu0 %v710, 127
        %v725 = vpop.permute.xlu0 %724
        %v726 = vmul.f32 %v171, %v725
        %v727 = vadd.f32 %v723, %v726
        %v728 = vmax.f32 %v727, 0.0
        %s729 = scalar_lea.vmem %s1, 48
        %v730 = vld [vmem:[%s729] sm:$0xff]
        %v731 = vld [vmem:[%s729 + $0x8] sm:$0xff]
        %v732 = vld [vmem:[%s729 + $0x10] sm:$0xff]
        %v734 = vsel %vm402, %v730, 0
        %v737 = vsel %vm402, %v731, 0
        %v740 = vsel %vm402, %v732, 0
        %742 = vmatprep.subr.mxu0 0.0
        %743 = vmatpush1.msra.mxu0 %v510
        %744 = vmatprep.subr.mxu0 0.0
        %745 = vmatpush1.msra.mxu0 0.0
        %746 = vmatprep.subr.mxu0 0.0
        %747 = vmatpush1.msra.mxu0 0.0
        %748 = vmatprep.subr.mxu0 0.0
        %749 = vmatpush1.msra.mxu0 0.0
        %750 = vmatprep.subr.mxu0 0.0
        %751 = vmatpush1.msra.mxu0 0.0
        %752 = vmatprep.subr.mxu0 0.0
        %753 = vmatpush1.msra.mxu0 0.0
        %754 = vmatprep.subr.mxu0 0.0
        %755 = vmatpush1.msra.mxu0 0.0
        %756 = vmatprep.subr.mxu0 0.0
        %757 = vmatpush1.msra.mxu0 0.0
        %758 = vmatprep.subr.mxu0 0.0
        %759 = vmatpush1.msra.mxu0 0.0
        %760 = vmatprep.subr.mxu0 0.0
        %761 = vmatpush1.msra.mxu0 0.0
        %762 = vmatprep.subr.mxu0 0.0
        %763 = vmatpush1.msra.mxu0 0.0
        %764 = vmatprep.subr.mxu0 0.0
        %765 = vmatpush1.msra.mxu0 0.0
        %766 = vmatprep.subr.mxu0 0.0
        %767 = vmatpush1.msra.mxu0 0.0
        %768 = vmatprep.subr.mxu0 0.0
        %769 = vmatpush1.msra.mxu0 0.0
        %770 = vmatprep.subr.mxu0 0.0
        %771 = vmatpush1.msra.mxu0 0.0
        %772 = vmatprep.subr.mxu0 0.0
        %773 = vmatpush1.msra.mxu0 0.0
        %774 = vmatprep.subr.mxu0 0.0
        %775 = vmatpush1.msra.mxu0 0.0
        %776 = vmatprep.subr.mxu0 0.0
        %777 = vmatpush1.msra.mxu0 0.0
        %778 = vmatprep.subr.mxu0 0.0
        %779 = vmatpush1.msra.mxu0 0.0
        %780 = vmatprep.subr.mxu0 0.0
        %781 = vmatpush1.msra.mxu0 0.0
        %782 = vmatprep.subr.mxu0 0.0
        %783 = vmatpush1.msra.mxu0 0.0
        %784 = vmatprep.subr.mxu0 0.0
        %785 = vmatpush1.msra.mxu0 0.0
        %786 = vmatprep.subr.mxu0 0.0
        %787 = vmatpush1.msra.mxu0 0.0
        %788 = vmatprep.subr.mxu0 0.0
        %789 = vmatpush1.msra.mxu0 0.0
        %790 = vmatprep.subr.mxu0 0.0
        %791 = vmatpush1.msra.mxu0 0.0
        %792 = vmatprep.subr.mxu0 0.0
        %793 = vmatpush1.msra.mxu0 0.0
        %794 = vmatprep.subr.mxu0 0.0
        %795 = vmatpush1.msra.mxu0 0.0
        %796 = vmatprep.subr.mxu0 0.0
        %797 = vmatpush1.msra.mxu0 0.0
        %798 = vmatprep.subr.mxu0 0.0
        %799 = vmatpush1.msra.mxu0 0.0
        %800 = vmatprep.subr.mxu0 0.0
        %801 = vmatpush1.msra.mxu0 0.0
        %802 = vmatprep.subr.mxu0 0.0
        %803 = vmatpush1.msra.mxu0 0.0
        %804 = vmatprep.subr.mxu0 0.0
        %805 = vmatpush1.msra.mxu0 0.0
        %806 = vmatprep.mubr.f32.mxu0 0.0
        %807 = vmatmul.mubr.f32.gmra.mrb[0].mxu0 %v734
        %v808 = vpop.f32.mrb[0].mxu0
        %v809 = vadd.f32 0.0, %v808
        %v810 = vpop.f32.mrb[0].mxu0
        %811 = vmatprep.mubr.f32.mxu0 0.0
        %812 = vmatmul.mubr.f32.gmra.mrb[0].mxu0 %v737
        %v813 = vpop.f32.mrb[0].mxu0
        %v814 = vadd.f32 0.0, %v813
        %v815 = vpop.f32.mrb[0].mxu0
        %816 = vmatprep.mubr.f32.mxu0 0.0
        %817 = vmatmul.mubr.f32.gmra.mrb[0].mxu0 %v740
        %v818 = vpop.f32.mrb[0].mxu0
        %v819 = vadd.f32 0.0, %v818
        %v820 = vpop.f32.mrb[0].mxu0
        %821 = vdwg.mxu0
        %s822 = scalar_lea.vmem %s2, 16
        %v823 = vld [vmem:[%s822] sm:$0xff]
        %825 = vset.pattern.permute.xlu0 0
        %826 = vperm.xlu0 %825, %v823
        %v827 = vpop.permute.xlu0 %826
        %v829 = vadd.f32 %v814, %v827
        %830 = vrot.lane.b32.xlu0 %v809, 1
        %v831 = vpop.permute.xlu0 %830
        %v832 = vmul.f32 %v169, %v831
        %v833 = vadd.f32 %v829, %v832
        %834 = vrot.lane.b32.xlu0 %v819, 127
        %v835 = vpop.permute.xlu0 %834
        %v836 = vmul.f32 %v171, %v835
        %v837 = vadd.f32 %v833, %v836
        %v838 = vmax.f32 %v837, 0.0
        %s839 = scalar_lea.vmem %s1, 144
        %v840 = vld [vmem:[%s839] sm:$0xff]
        %v841 = vld [vmem:[%s839 + $0x8] sm:$0xff]
        %v842 = vld [vmem:[%s839 + $0x10] sm:$0xff]
        %v844 = vsel %vm402, %v840, 0
        %v847 = vsel %vm402, %v841, 0
        %v850 = vsel %vm402, %v842, 0
        %852 = vmatprep.subr.mxu0 0.0
        %853 = vmatpush1.msra.mxu0 %v620
        %854 = vmatprep.subr.mxu0 0.0
        %855 = vmatpush1.msra.mxu0 0.0
        %856 = vmatprep.subr.mxu0 0.0
        %857 = vmatpush1.msra.mxu0 0.0
        %858 = vmatprep.subr.mxu0 0.0
        %859 = vmatpush1.msra.mxu0 0.0
        %860 = vmatprep.subr.mxu0 0.0
        %861 = vmatpush1.msra.mxu0 0.0
        %862 = vmatprep.subr.mxu0 0.0
        %863 = vmatpush1.msra.mxu0 0.0
        %864 = vmatprep.subr.mxu0 0.0
        %865 = vmatpush1.msra.mxu0 0.0
        %866 = vmatprep.subr.mxu0 0.0
        %867 = vmatpush1.msra.mxu0 0.0
        %868 = vmatprep.subr.mxu0 0.0
        %869 = vmatpush1.msra.mxu0 0.0
        %870 = vmatprep.subr.mxu0 0.0
        %871 = vmatpush1.msra.mxu0 0.0
        %872 = vmatprep.subr.mxu0 0.0
        %873 = vmatpush1.msra.mxu0 0.0
        %874 = vmatprep.subr.mxu0 0.0
        %875 = vmatpush1.msra.mxu0 0.0
        %876 = vmatprep.subr.mxu0 0.0
        %877 = vmatpush1.msra.mxu0 0.0
        %878 = vmatprep.subr.mxu0 0.0
        %879 = vmatpush1.msra.mxu0 0.0
        %880 = vmatprep.subr.mxu0 0.0
        %881 = vmatpush1.msra.mxu0 0.0
        %882 = vmatprep.subr.mxu0 0.0
        %883 = vmatpush1.msra.mxu0 0.0
        %884 = vmatprep.subr.mxu0 0.0
        %885 = vmatpush1.msra.mxu0 0.0
        %886 = vmatprep.subr.mxu0 0.0
        %887 = vmatpush1.msra.mxu0 0.0
        %888 = vmatprep.subr.mxu0 0.0
        %889 = vmatpush1.msra.mxu0 0.0
        %890 = vmatprep.subr.mxu0 0.0
        %891 = vmatpush1.msra.mxu0 0.0
        %892 = vmatprep.subr.mxu0 0.0
        %893 = vmatpush1.msra.mxu0 0.0
        %894 = vmatprep.subr.mxu0 0.0
        %895 = vmatpush1.msra.mxu0 0.0
        %896 = vmatprep.subr.mxu0 0.0
        %897 = vmatpush1.msra.mxu0 0.0
        %898 = vmatprep.subr.mxu0 0.0
        %899 = vmatpush1.msra.mxu0 0.0
        %900 = vmatprep.subr.mxu0 0.0
        %901 = vmatpush1.msra.mxu0 0.0
        %902 = vmatprep.subr.mxu0 0.0
        %903 = vmatpush1.msra.mxu0 0.0
        %904 = vmatprep.subr.mxu0 0.0
        %905 = vmatpush1.msra.mxu0 0.0
        %906 = vmatprep.subr.mxu0 0.0
        %907 = vmatpush1.msra.mxu0 0.0
        %908 = vmatprep.subr.mxu0 0.0
        %909 = vmatpush1.msra.mxu0 0.0
        %910 = vmatprep.subr.mxu0 0.0
        %911 = vmatpush1.msra.mxu0 0.0
        %912 = vmatprep.subr.mxu0 0.0
        %913 = vmatpush1.msra.mxu0 0.0
        %914 = vmatprep.subr.mxu0 0.0
        %915 = vmatpush1.msra.mxu0 0.0
        %916 = vmatprep.mubr.f32.mxu0 0.0
        %917 = vmatmul.mubr.f32.gmra.mrb[0].mxu0 %v844
        %v918 = vpop.f32.mrb[0].mxu0
        %v919 = vadd.f32 0.0, %v918
        %v920 = vpop.f32.mrb[0].mxu0
        %921 = vmatprep.mubr.f32.mxu0 0.0
        %922 = vmatmul.mubr.f32.gmra.mrb[0].mxu0 %v847
        %v923 = vpop.f32.mrb[0].mxu0
        %v924 = vadd.f32 0.0, %v923
        %v925 = vpop.f32.mrb[0].mxu0
        %926 = vmatprep.mubr.f32.mxu0 0.0
        %927 = vmatmul.mubr.f32.gmra.mrb[0].mxu0 %v850
        %v928 = vpop.f32.mrb[0].mxu0
        %v929 = vadd.f32 0.0, %v928
        %v930 = vpop.f32.mrb[0].mxu0
        %931 = vdwg.mxu0
        %s932 = scalar_lea.vmem %s2, 48
        %v933 = vld [vmem:[%s932] sm:$0xff]
        %935 = vset.pattern.permute.xlu0 0
        %936 = vperm.xlu0 %935, %v933
        %v937 = vpop.permute.xlu0 %936
        %v939 = vadd.f32 %v924, %v937
        %940 = vrot.lane.b32.xlu0 %v919, 1
        %v941 = vpop.permute.xlu0 %940
        %v942 = vmul.f32 %v169, %v941
        %v943 = vadd.f32 %v939, %v942
        %944 = vrot.lane.b32.xlu0 %v929, 127
        %v945 = vpop.permute.xlu0 %944
        %v946 = vmul.f32 %v171, %v945
        %v947 = vadd.f32 %v943, %v946
        %v948 = vmax.f32 %v947, 0.0
        %v949 = vadd.f32 %v728, %v838
        %v950 = vadd.f32 %v949, %v948
        %v951 = vmul.f32 %v950, 0.33333334
        %952 = vst [vmem:[%s161] sm:$0xff] %v951
        %s953 = sand.u32 %s93, 1
        %s954 = scalar_lea.sflag [#allocation3], %s953
        %s955 = sand.u32 %s93, 1
        %s956 = smul.addr %s955, 8
        %s957 = scalar_lea.vmem [#allocation2], %s956
        // Predicated region
        $region33: #{tpu_custom_call.1} parent=31 // pred_check
          %p958 = pneg %p103
        $region34: #{tpu_custom_call.1} parent=31 // pred_check_branch
          %960 = sbr.rel (%p958) target = $region36
        $region35: #{tpu_custom_call.1} parent=31 // pred_region
          %s962 = ssub.s32 128, 128
          %963 = vsyncadd %s954, %s962
          %s964 = smul.addr %s17, 128
          %s965 = scalar_lea.hbm %s3, %s964
          %s967 = sshll.u32 %s957, 4
          %s968 = int_to_ptr.vmem [resolvable:$true] %s967
          %970 = dma.vmem_to_hbm [thread:$0]  %s968, 128, %s965, %s954
        $region36: #{tpu_custom_call.1} parent=31 // pred_fallthru
          _
      $region32: #{tpu_custom_call.1} parent=5 // pred_fallthru
        _
      %p971 = scmp.le.s32.totalorder 2, %s12
      // Predicated region
      $region37: #{tpu_custom_call.1} parent=5 // pred_check
        %p972 = pneg %p971
      $region38: #{tpu_custom_call.1} parent=5 // pred_check_branch
        %974 = sbr.rel (%p972) target = $region40
      $region39: #{tpu_custom_call.1} parent=5 // pred_region
        %s975 = ssub.s32 %s12, 2
        // Predicated region
        $region41: #{tpu_custom_call.1} parent=39 // pred_check
          %p976 = pneg %p109
        $region42: #{tpu_custom_call.1} parent=39 // pred_check_branch
          %978 = sbr.rel (%p976) target = $region44
        $region43: #{tpu_custom_call.1} parent=39 // pred_region
          %s979 = sand.u32 %s94, 1
          %s980 = scalar_lea.sflag [#allocation3], %s979
          %s981 = sand.u32 %s94, 1
          %s982 = smul.addr %s981, 8
          %s983 = scalar_lea.vmem [#allocation2], %s982
          %984 = dma.done %s980, 128
        $region44: #{tpu_custom_call.1} parent=39 // pred_fallthru
          _
      $region40: #{tpu_custom_call.1} parent=5 // pred_fallthru
        _
    $region6: #{tpu_custom_call.1} parent=1 // loop_footer
      %s16 = sadd.s32 1, %s12
    $region7: #{tpu_custom_call.1} parent=1 // loop_footer_branch
      %11 = sbr.rel target = $region3
    $region8: #{tpu_custom_call.1} parent=1 // loop_exit
      _
    %985 = vsyncpa [#allocation3], 1
    %s986 = scalar_lea.sflag [#allocation3], 1
    %987 = vsyncpa %s986, 1

</llo_original>
